<compile_context>
chip_gen: v7x
topology: tpu7x:2x2x1
jax: 0.10.0
libtpu: 0.0.40
codegen_flags: <defaults>
</compile_context>

<pallas_src>
import functools

import jax
import jax.numpy as jnp
from jax.experimental import pallas as pl
from jax.experimental.pallas import tpu as pltpu


def _round_up(x, m):
    return (x + m - 1) // m * m


def _stats_kernel(cols_ref, w_ref, sum_ref, sumsq_ref):
    """Pass 1: accumulate per-channel sum / sumsq of y = cols @ w over all rows."""
    @pl.when(pl.program_id(0) == 0)
    def _init():
        sum_ref[...] = jnp.zeros_like(sum_ref)
        sumsq_ref[...] = jnp.zeros_like(sumsq_ref)

    y = jnp.dot(cols_ref[...], w_ref[...], preferred_element_type=jnp.float32)
    sum_ref[...] += jnp.sum(y, axis=0, keepdims=True)
    sumsq_ref[...] += jnp.sum(y * y, axis=0, keepdims=True)


def _bn_glu_kernel(cols_ref, w_ref, sum_ref, sumsq_ref, gamma_ref, beta_ref,
                   out_ref, *, inv_m, eps, c_half):
    """Pass 2: y = cols @ w, BatchNorm with global stats, GLU along channels."""
    y = jnp.dot(cols_ref[...], w_ref[...], preferred_element_type=jnp.float32)
    mean = sum_ref[...] * inv_m
    var = sumsq_ref[...] * inv_m - mean * mean          # biased variance (PyTorch train)
    scale = gamma_ref[...] * jax.lax.rsqrt(var + eps)
    shift = beta_ref[...] - mean * scale
    y_bn = y * scale + shift                            # f32 elementwise (v5e-safe)
    a = y_bn[:, :c_half]                                # lane-aligned: c_half % 128 == 0
    g = y_bn[:, c_half:]
    out_ref[...] = (a * jax.nn.sigmoid(g)).astype(out_ref.dtype)


def deconv1d_bn_glu(x, w, bias, gamma, beta, *, stride=1, padding=0,
                    output_padding=0, dilation=1, eps=1e-5,
                    mxu_dtype=jnp.bfloat16):
    """x: (N, Cin, L); w: (Cin, 2*Cout, K) [PyTorch ConvTranspose1d layout]."""
    # bias is folded away: BN subtracts the batch mean, so a per-channel constant
    # shift cancels exactly in the output (only the running stats would see it).
    del bias
    N, Cin, L = x.shape
    Cin_w, C2, K = w.shape
    assert Cin_w == Cin and C2 % 2 == 0
    Cout = C2 // 2
    Lout = (L - 1) * stride - 2 * padding + dilation * (K - 1) + output_padding + 1

    # --- glue (plain JAX): transposed conv as a dense matmul on im2col -------
    # TODO(synk): polyphase decomposition / in-kernel gather would remove the
    # K*stride-fold HBM duplication of this im2col; kept in the wrapper here.
    x_up = jnp.zeros((N, Cin, (L - 1) * stride + 1), x.dtype)
    x_up = x_up.at[:, :, ::stride].set(x)
    pad = dilation * (K - 1) - padding
    assert pad >= 0  # TODO(synk): padding > dilation*(K-1) would need output cropping
    x_pad = jnp.pad(x_up, ((0, 0), (0, 0), (pad, pad + output_padding)))
    t_idx = jnp.arange(Lout)[:, None] + dilation * jnp.arange(K)[None, :]   # (Lout, K)
    cols = x_pad[:, :, t_idx]                                # (N, Cin, Lout, K)
    cols = cols.transpose(0, 2, 1, 3).reshape(N * Lout, Cin * K)
    wmat = jnp.flip(w, axis=2).transpose(0, 2, 1).reshape(Cin * K, C2)

    # --- MXU / lane-friendly padding -----------------------------------------
    M, CK = N * Lout, Cin * K
    CKp = _round_up(CK, 128)                 # contraction dim -> 128-lane multiple
    Coutp = _round_up(Cout, 128)             # each GLU half on its own 128-lane block
    C2p = 2 * Coutp
    TM = min(512, _round_up(M, 128))         # row tile (re-derived from M)
    Mp = _round_up(M, TM)
    n_tiles = Mp // TM

    # bf16 MXU operands (f32 accumulate); padded rows/lanes are exact zeros, so
    # they contribute nothing to the BN sums (bias was folded away above).
    cols_p = jnp.zeros((Mp, CKp), mxu_dtype).at[:M, :CK].set(cols.astype(mxu_dtype))
    w_p = jnp.zeros((CKp, C2p), mxu_dtype)
    w_p = w_p.at[:CK, :Cout].set(wmat[:, :Cout].astype(mxu_dtype))
    w_p = w_p.at[:CK, Coutp:Coutp + Cout].set(wmat[:, Cout:].astype(mxu_dtype))

    gamma_f = gamma.astype(jnp.float32)
    beta_f = beta.astype(jnp.float32)
    gamma_p = jnp.zeros((1, C2p), jnp.float32)
    gamma_p = gamma_p.at[0, :Cout].set(gamma_f[:Cout])
    gamma_p = gamma_p.at[0, Coutp:Coutp + Cout].set(gamma_f[Cout:])
    beta_p = jnp.zeros((1, C2p), jnp.float32)
    beta_p = beta_p.at[0, :Cout].set(beta_f[:Cout])
    beta_p = beta_p.at[0, Coutp:Coutp + Cout].set(beta_f[Cout:])

    # --- explicit VMEM budget: double-buffered tiles + in-kernel temporaries,
    #     with headroom; stays well inside v7x's 64 MiB physical VMEM ---------
    isz = jnp.dtype(mxu_dtype).itemsize
    working = 2 * (TM * CKp * isz + CKp * C2p * isz
                   + TM * C2p * 4 + TM * Coutp * 4 + 4 * C2p * 4)
    vmem_limit = int(min(max(4 * working, 8 * 1024 * 1024), 48 * 1024 * 1024))

    # --- pass 1: global BN statistics (sum / sumsq) over all N*Lout rows -----
    sum_c, sumsq_c = pl.pallas_call(
        _stats_kernel,
        out_shape=(jax.ShapeDtypeStruct((1, C2p), jnp.float32),
                   jax.ShapeDtypeStruct((1, C2p), jnp.float32)),
        grid=(n_tiles,),
        in_specs=[pl.BlockSpec((TM, CKp), lambda i: (i, 0)),
                  pl.BlockSpec((CKp, C2p), lambda i: (0, 0))],
        out_specs=(pl.BlockSpec((1, C2p), lambda i: (0, 0)),
                   pl.BlockSpec((1, C2p), lambda i: (0, 0))),
        compiler_params=pltpu.CompilerParams(
            dimension_semantics=("arbitrary",),      # accumulator across tiles
            vmem_limit_bytes=vmem_limit),
    )(cols_p, w_p)

    # --- pass 2: normalize + GLU; tiles independent -> "parallel" ------------
    out_p = pl.pallas_call(
        functools.partial(_bn_glu_kernel, inv_m=1.0 / M, eps=eps, c_half=Coutp),
        out_shape=jax.ShapeDtypeStruct((Mp, Coutp), x.dtype),
        grid=(n_tiles,),
        in_specs=[pl.BlockSpec((TM, CKp), lambda i: (i, 0)),
                  pl.BlockSpec((CKp, C2p), lambda i: (0, 0)),
                  pl.BlockSpec((1, C2p), lambda i: (0, 0)),
                  pl.BlockSpec((1, C2p), lambda i: (0, 0)),
                  pl.BlockSpec((1, C2p), lambda i: (0, 0)),
                  pl.BlockSpec((1, C2p), lambda i: (0, 0))],
        out_specs=pl.BlockSpec((TM, Coutp), lambda i: (i, 0)),
        compiler_params=pltpu.CompilerParams(
            dimension_semantics=("parallel",),
            vmem_limit_bytes=vmem_limit),
    )(cols_p, w_p, sum_c, sumsq_c, gamma_p, beta_p)

    out = out_p[:M, :Cout]                                   # crop row/lane padding
    return out.reshape(N, Lout, Cout).transpose(0, 2, 1)     # back to NCL


def _reference(x, w, bias, gamma, beta, *, stride, padding, output_padding,
               dilation, eps=1e-5):
    """Pure-JAX scatter-style ConvTranspose1d + BN(train) + GLU, for checking."""
    N, Cin, L = x.shape
    _, C2, K = w.shape
    Lout = (L - 1) * stride - 2 * padding + dilation * (K - 1) + output_padding + 1
    Lfull = (L - 1) * stride + (K - 1) * dilation + 1
    y = jnp.zeros((N, C2, Lfull), jnp.float32)
    for l in range(L):
        for k in range(K):
            t = l * stride + k * dilation
            y = y.at[:, :, t].add(jnp.einsum('nc,cd->nd', x[:, :, l], w[:, :, k]))
    y = jnp.pad(y, ((0, 0), (0, 0), (0, output_padding)))
    y = y[:, :, padding:padding + Lout] + bias[None, :, None]
    mean = y.mean(axis=(0, 2), keepdims=True)
    var = jnp.square(y - mean).mean(axis=(0, 2), keepdims=True)
    yn = (y - mean) / jnp.sqrt(var + eps)
    yn = yn * gamma[None, :, None] + beta[None, :, None]
    a, b = yn[:, :C2 // 2], yn[:, C2 // 2:]
    return a * jax.nn.sigmoid(b)


if __name__ == "__main__":
    # small shapes consistent with the module
    N, Cin, Cout, L, K = 2, 4, 8, 16, 4
    stride, padding, output_padding, dilation = 2, 1, 1, 1

    key = jax.random.PRNGKey(0)
    kx, kw, kb, kg, kbeta = jax.random.split(key, 5)
    x = jax.random.normal(kx, (N, Cin, L), jnp.float32)
    # ConvTranspose1d weight layout: (in_channels, 2*out_channels, kernel_size)
    w = 0.2 * jax.random.normal(kw, (Cin, 2 * Cout, K), jnp.float32)
    bias = 0.1 * jax.random.normal(kb, (2 * Cout,), jnp.float32)
    gamma = 1.0 + 0.1 * jax.random.normal(kg, (2 * Cout,), jnp.float32)
    beta = 0.1 * jax.random.normal(kbeta, (2 * Cout,), jnp.float32)

    ref = _reference(x, w, bias, gamma, beta, stride=stride, padding=padding,
                     output_padding=output_padding, dilation=dilation)

    # f32 MXU path: tight tolerance against the pure-JAX reference.
    out_f32 = deconv1d_bn_glu(x, w, bias, gamma, beta, stride=stride,
                              padding=padding, output_padding=output_padding,
                              dilation=dilation, mxu_dtype=jnp.float32)
    out_f32 = jax.block_until_ready(out_f32)
    assert out_f32.shape == ref.shape
    assert jnp.allclose(out_f32, ref, atol=1e-4, rtol=1e-4)

    # bf16 MXU path (default, per perf guidance): f32 accumulate/BN, looser tol.
    out_bf16 = deconv1d_bn_glu(x, w, bias, gamma, beta, stride=stride,
                               padding=padding, output_padding=output_padding,
                               dilation=dilation)
    out_bf16 = jax.block_until_ready(out_bf16)
    assert out_bf16.shape == ref.shape
    assert bool(jnp.all(jnp.isfinite(out_bf16)))
    assert jnp.allclose(out_bf16, ref, atol=1e-1, rtol=1e-1)

    print("KERNEL_OK")
</pallas_src>

<mosaic_0001>
module attributes {stable_mosaic.version = 11 : i64} {
  func.func @_stats_kernel(%arg0: i32, %arg1: memref<128x128xf32, #tpu.memory_space<vmem>>, %arg2: memref<128x256xf32, #tpu.memory_space<vmem>>, %arg3: memref<1x256xf32, #tpu.memory_space<vmem>>, %arg4: memref<1x256xf32, #tpu.memory_space<vmem>>) attributes {dimension_semantics = [#tpu.dimension_semantics<arbitrary>], iteration_bounds = array<i64: 1>, scalar_prefetch = 0 : i64, scratch_operands = 0 : i64, tpu.core_type = #tpu.core_type<tc>, window_params = [{transform_indices = @transform_0, window_bounds = array<i64: 128, 128>}, {pipeline_mode = #tpu.pipeline_mode<synchronous>, transform_indices = @transform_1, window_bounds = array<i64: 128, 256>}, {pipeline_mode = #tpu.pipeline_mode<synchronous>, transform_indices = @transform_2, window_bounds = array<i64: 1, 256>}, {pipeline_mode = #tpu.pipeline_mode<synchronous>, transform_indices = @transform_3, window_bounds = array<i64: 1, 256>}]} {
    %c0_i32 = arith.constant 0 : i32
    %0 = arith.cmpi eq, %arg0, %c0_i32 : i32
    %1 = arith.extui %0 : i1 to i32
    %c0_i32_0 = arith.constant 0 : i32
    %2 = arith.cmpi ne, %1, %c0_i32_0 : i32
    scf.if %2 {
      %cst_14 = arith.constant 0.000000e+00 : f32
      %17 = vector.broadcast %cst_14 : f32 to vector<1x256xf32>
      %c0_15 = arith.constant 0 : index
      %c0_16 = arith.constant 0 : index
      %18 = vector.load %arg3[%c0_15, %c0_16] : memref<1x256xf32, #tpu.memory_space<vmem>>, vector<1x256xf32>
      tpu.vector_store %arg3[%c0_15, %c0_16], %17 {strides = array<i32>} : memref<1x256xf32, #tpu.memory_space<vmem>>, vector<1x256xf32>,
      %cst_17 = arith.constant 0.000000e+00 : f32
      %19 = vector.broadcast %cst_17 : f32 to vector<1x256xf32>
      %c0_18 = arith.constant 0 : index
      %c0_19 = arith.constant 0 : index
      %20 = vector.load %arg4[%c0_18, %c0_19] : memref<1x256xf32, #tpu.memory_space<vmem>>, vector<1x256xf32>
      tpu.vector_store %arg4[%c0_18, %c0_19], %19 {strides = array<i32>} : memref<1x256xf32, #tpu.memory_space<vmem>>, vector<1x256xf32>,
    } else {
    }
    %c0 = arith.constant 0 : index
    %c0_1 = arith.constant 0 : index
    %3 = vector.load %arg1[%c0, %c0_1] : memref<128x128xf32, #tpu.memory_space<vmem>>, vector<128x128xf32>
    %c0_2 = arith.constant 0 : index
    %c0_3 = arith.constant 0 : index
    %4 = vector.load %arg2[%c0_2, %c0_3] : memref<128x256xf32, #tpu.memory_space<vmem>>, vector<128x256xf32>
    %cst = arith.constant dense<0.000000e+00> : vector<128x256xf32>
    %5 = tpu.matmul %3, %4, %cst {dimension_numbers = #tpu.dot_dimension_numbers<[1], [0], [0], [1], [0, 0, 1, 1], [], []>} : vector<128x128xf32>, vector<128x256xf32>, vector<128x256xf32> -> vector<128x256xf32>
    %c0_4 = arith.constant 0 : index
    %c0_5 = arith.constant 0 : index
    %6 = vector.load %arg3[%c0_4, %c0_5] : memref<1x256xf32, #tpu.memory_space<vmem>>, vector<1x256xf32>
    %cst_6 = arith.constant dense<0.000000e+00> : vector<256xf32>
    %7 = vector.multi_reduction <add>, %5, %cst_6 [0] : vector<128x256xf32> to vector<256xf32>
    %8 = vector.shape_cast %7 : vector<256xf32> to vector<1x256xf32>
    %9 = arith.addf %6, %8 : vector<1x256xf32>
    %c0_7 = arith.constant 0 : index
    %c0_8 = arith.constant 0 : index
    %10 = vector.load %arg3[%c0_7, %c0_8] : memref<1x256xf32, #tpu.memory_space<vmem>>, vector<1x256xf32>
    tpu.vector_store %arg3[%c0_7, %c0_8], %9 {strides = array<i32>} : memref<1x256xf32, #tpu.memory_space<vmem>>, vector<1x256xf32>,
    %c0_9 = arith.constant 0 : index
    %c0_10 = arith.constant 0 : index
    %11 = vector.load %arg4[%c0_9, %c0_10] : memref<1x256xf32, #tpu.memory_space<vmem>>, vector<1x256xf32>
    %12 = arith.mulf %5, %5 : vector<128x256xf32>
    %cst_11 = arith.constant dense<0.000000e+00> : vector<256xf32>
    %13 = vector.multi_reduction <add>, %12, %cst_11 [0] : vector<128x256xf32> to vector<256xf32>
    %14 = vector.shape_cast %13 : vector<256xf32> to vector<1x256xf32>
    %15 = arith.addf %11, %14 : vector<1x256xf32>
    %c0_12 = arith.constant 0 : index
    %c0_13 = arith.constant 0 : index
    %16 = vector.load %arg4[%c0_12, %c0_13] : memref<1x256xf32, #tpu.memory_space<vmem>>, vector<1x256xf32>
    tpu.vector_store %arg4[%c0_12, %c0_13], %15 {strides = array<i32>} : memref<1x256xf32, #tpu.memory_space<vmem>>, vector<1x256xf32>,
    return
  }
  func.func @transform_0(%arg0: i32) -> (i32, i32) {
    %c0_i32 = arith.constant 0 : i32
    %c0_i32_0 = arith.constant 0 : i32
    return %arg0, %c0_i32 : i32, i32
  }
  func.func @transform_1(%arg0: i32) -> (i32, i32) {
    %c0_i32 = arith.constant 0 : i32
    %c0_i32_0 = arith.constant 0 : i32
    %c0_i32_1 = arith.constant 0 : i32
    return %c0_i32, %c0_i32_0 : i32, i32
  }
  func.func @transform_2(%arg0: i32) -> (i32, i32) {
    %c0_i32 = arith.constant 0 : i32
    %c0_i32_0 = arith.constant 0 : i32
    %c0_i32_1 = arith.constant 0 : i32
    return %c0_i32, %c0_i32_0 : i32, i32
  }
  func.func @transform_3(%arg0: i32) -> (i32, i32) {
    %c0_i32 = arith.constant 0 : i32
    %c0_i32_0 = arith.constant 0 : i32
    %c0_i32_1 = arith.constant 0 : i32
    return %c0_i32, %c0_i32_0 : i32, i32
  }
}

</mosaic_0001>

<llo_original>
// kernel: tpu_custom_call.1
$region0: #{tpu_custom_call.1}
  #allocation0 [shape = 'u32[]', space=smem, size = 0x4, offset = 0x4, fixed_abs, tag = 'smem constant byte address 0x4 - core index']
  #allocation1 [shape = 'u32[144,128]{1,0:T(1,128)}', space=vmem, size = 0x12000, scoped, tag = 'internal scratch']
  %s0 = inlined_call_operand.hbm [shape: f32[128,128], index: 0, kind: input, shape index: {}]
  %s1 = inlined_call_operand.hbm [shape: f32[128,256], index: 1, kind: input, shape index: {}]
  %s2 = inlined_call_operand.hbm [shape: f32[1,256], index: 2, kind: output, shape index: {0}]
  %s3 = inlined_call_operand.hbm [shape: f32[1,256], index: 3, kind: output, shape index: {1}]
  %4 = xla_tuple %s2, %s3
  %s5 = sld [smem:[#allocation0]]
  $region38: #{tpu_custom_call.1} parent=0
    _
  %s7 = ssub.s32 1, %s5
  %s8 = scalar_select 0, %s7, %s5
  $region1: #{tpu_custom_call.1} parent=0
    #allocation2 [shape = 'u8[65536]{0}', space=vmem, size = 0x10000, scoped, tag = 'input window, operand 0, single buffered']
    #allocation3 [shape = 's32[1]{0}', space=sflag, size = 0x4, scoped, tag = 'scoped memory for tpu_custom_call.1']
    #allocation4 [shape = 's32[1]{0}', space=sflag, size = 0x4, scoped, tag = 'scoped memory for tpu_custom_call.1']
    #allocation5 [shape = 'u8[131072]{0}', space=vmem, size = 0x20000, scoped, tag = 'input window, operand 1, single buffered']
    #allocation6 [shape = 's32[1]{0}', space=sflag, size = 0x4, scoped, tag = 'scoped memory for tpu_custom_call.1']
    #allocation7 [shape = 'u8[1024]{0}', space=vmem, size = 0x400, scoped, tag = 'output window, operand 0, single buffered']
    #allocation8 [shape = 'u8[1024]{0}', space=vmem, size = 0x400, scoped, tag = 'output window, operand 1, single buffered']
    #allocation9 [shape = 's32[1]{0}', space=sflag, size = 0x4, scoped, tag = 'scoped memory for tpu_custom_call.1']
    %9 = vsyncpa [#allocation3], 0
    %10 = vsyncpa [#allocation6], 0
    %11 = vsyncpa [#allocation4], 0
    %12 = vsyncpa [#allocation9], 0
    // Predicated region
    $region2: #{tpu_custom_call.1} parent=1 // pred_check
      _
    $region3: #{tpu_custom_call.1} parent=1 // pred_check_branch
      %14 = sbr.rel (0) target = $region5
    $region4: #{tpu_custom_call.1} parent=1 // pred_region
      %s16 = ssub.s32 2048, 2048
      %17 = vsyncadd [#allocation3], %s16
      %s18 = sshll.u32 [#allocation2], 4
      %s19 = int_to_ptr.vmem [resolvable:$true] %s18
      %24 = dma.hbm_to_vmem [thread:$0]  %s0, 2048, %s19, [#allocation3], 128, 128, 8
    $region5: #{tpu_custom_call.1} parent=1 // pred_fallthru
      _
    // Predicated region
    $region6: #{tpu_custom_call.1} parent=1 // pred_check
      _
    $region7: #{tpu_custom_call.1} parent=1 // pred_check_branch
      %26 = sbr.rel (0) target = $region9
    $region8: #{tpu_custom_call.1} parent=1 // pred_region
      %s28 = ssub.s32 4096, 4096
      %29 = vsyncadd [#allocation6], %s28
      %s30 = sshll.u32 [#allocation5], 4
      %s31 = int_to_ptr.vmem [resolvable:$true] %s30
      %36 = dma.hbm_to_vmem [thread:$0]  %s1, 4096, %s31, [#allocation6], 256, 256, 16
    $region9: #{tpu_custom_call.1} parent=1 // pred_fallthru
      _
    // Predicated region
    $region10: #{tpu_custom_call.1} parent=1 // pred_check
      _
    $region11: #{tpu_custom_call.1} parent=1 // pred_check_branch
      %38 = sbr.rel (0) target = $region13
    $region12: #{tpu_custom_call.1} parent=1 // pred_region
      %39 = dma.done [#allocation3], 2048
    $region13: #{tpu_custom_call.1} parent=1 // pred_fallthru
      _
    // Predicated region
    $region14: #{tpu_custom_call.1} parent=1 // pred_check
      _
    $region15: #{tpu_custom_call.1} parent=1 // pred_check_branch
      %41 = sbr.rel (0) target = $region17
    $region16: #{tpu_custom_call.1} parent=1 // pred_region
      %42 = dma.done [#allocation6], 4096
    $region17: #{tpu_custom_call.1} parent=1 // pred_fallthru
      _
    %p43 = scmp.eq.s32.totalorder 0, 0
    // Predicated region
    $region18: #{tpu_custom_call.1} parent=1 // pred_check
      %p44 = pneg %p43
    $region19: #{tpu_custom_call.1} parent=1 // pred_check_branch
      %46 = sbr.rel (%p44) target = $region21
    $region20: #{tpu_custom_call.1} parent=1 // pred_region
      %v47 = vlaneseq
      %vm48 = vcmp.ge.s32.totalorder %v47, 0
      %vm49 = vcmp.lt.s32.totalorder %v47, 256
      %vm50 = vmand %vm48, %vm49
      %51 = vst.msk [vmem:[#allocation7] sm:$0x3] %vm50, 0.0
      %52 = vst.msk [vmem:[#allocation8] sm:$0x3] %vm50, 0.0
    $region21: #{tpu_custom_call.1} parent=1 // pred_fallthru
      _
    %v53 = vld [vmem:[#allocation2] sm:$0xff]
    %v54 = vld [vmem:[#allocation2 + $0x8] sm:$0xff]
    %v55 = vld [vmem:[#allocation2 + $0x10] sm:$0xff]
    %v56 = vld [vmem:[#allocation2 + $0x18] sm:$0xff]
    %v57 = vld [vmem:[#allocation2 + $0x20] sm:$0xff]
    %v58 = vld [vmem:[#allocation2 + $0x28] sm:$0xff]
    %v59 = vld [vmem:[#allocation2 + $0x30] sm:$0xff]
    %v60 = vld [vmem:[#allocation2 + $0x38] sm:$0xff]
    %v61 = vld [vmem:[#allocation2 + $0x40] sm:$0xff]
    %v62 = vld [vmem:[#allocation2 + $0x48] sm:$0xff]
    %v63 = vld [vmem:[#allocation2 + $0x50] sm:$0xff]
    %v64 = vld [vmem:[#allocation2 + $0x58] sm:$0xff]
    %v65 = vld [vmem:[#allocation2 + $0x60] sm:$0xff]
    %v66 = vld [vmem:[#allocation2 + $0x68] sm:$0xff]
    %v67 = vld [vmem:[#allocation2 + $0x70] sm:$0xff]
    %v68 = vld [vmem:[#allocation2 + $0x78] sm:$0xff]
    %v69 = vld [vmem:[#allocation5] sm:$0xff]
    %v70 = vld [vmem:[#allocation5 + $0x8] sm:$0xff]
    %v71 = vld [vmem:[#allocation5 + $0x10] sm:$0xff]
    %v72 = vld [vmem:[#allocation5 + $0x18] sm:$0xff]
    %v73 = vld [vmem:[#allocation5 + $0x20] sm:$0xff]
    %v74 = vld [vmem:[#allocation5 + $0x28] sm:$0xff]
    %v75 = vld [vmem:[#allocation5 + $0x30] sm:$0xff]
    %v76 = vld [vmem:[#allocation5 + $0x38] sm:$0xff]
    %v77 = vld [vmem:[#allocation5 + $0x40] sm:$0xff]
    %v78 = vld [vmem:[#allocation5 + $0x48] sm:$0xff]
    %v79 = vld [vmem:[#allocation5 + $0x50] sm:$0xff]
    %v80 = vld [vmem:[#allocation5 + $0x58] sm:$0xff]
    %v81 = vld [vmem:[#allocation5 + $0x60] sm:$0xff]
    %v82 = vld [vmem:[#allocation5 + $0x68] sm:$0xff]
    %v83 = vld [vmem:[#allocation5 + $0x70] sm:$0xff]
    %v84 = vld [vmem:[#allocation5 + $0x78] sm:$0xff]
    %v85 = vld [vmem:[#allocation5 + $0x80] sm:$0xff]
    %v86 = vld [vmem:[#allocation5 + $0x88] sm:$0xff]
    %v87 = vld [vmem:[#allocation5 + $0x90] sm:$0xff]
    %v88 = vld [vmem:[#allocation5 + $0x98] sm:$0xff]
    %v89 = vld [vmem:[#allocation5 + $0xa0] sm:$0xff]
    %v90 = vld [vmem:[#allocation5 + $0xa8] sm:$0xff]
    %v91 = vld [vmem:[#allocation5 + $0xb0] sm:$0xff]
    %v92 = vld [vmem:[#allocation5 + $0xb8] sm:$0xff]
    %v93 = vld [vmem:[#allocation5 + $0xc0] sm:$0xff]
    %v94 = vld [vmem:[#allocation5 + $0xc8] sm:$0xff]
    %v95 = vld [vmem:[#allocation5 + $0xd0] sm:$0xff]
    %v96 = vld [vmem:[#allocation5 + $0xd8] sm:$0xff]
    %v97 = vld [vmem:[#allocation5 + $0xe0] sm:$0xff]
    %v98 = vld [vmem:[#allocation5 + $0xe8] sm:$0xff]
    %v99 = vld [vmem:[#allocation5 + $0xf0] sm:$0xff]
    %v100 = vld [vmem:[#allocation5 + $0xf8] sm:$0xff]
    %101 = vmatprep.subr.mxu0 %v70
    %102 = vmatpush1.msra.mxu0 %v69
    %103 = vmatprep.subr.mxu0 %v72
    %104 = vmatpush1.msra.mxu0 %v71
    %105 = vmatprep.subr.mxu0 %v74
    %106 = vmatpush1.msra.mxu0 %v73
    %107 = vmatprep.subr.mxu0 %v76
    %108 = vmatpush1.msra.mxu0 %v75
    %109 = vmatprep.subr.mxu0 %v78
    %110 = vmatpush1.msra.mxu0 %v77
    %111 = vmatprep.subr.mxu0 %v80
    %112 = vmatpush1.msra.mxu0 %v79
    %113 = vmatprep.subr.mxu0 %v82
    %114 = vmatpush1.msra.mxu0 %v81
    %115 = vmatprep.subr.mxu0 %v84
    %116 = vmatpush1.msra.mxu0 %v83
    %117 = vmatprep.subr.mxu0 %v86
    %118 = vmatpush1.msra.mxu0 %v85
    %119 = vmatprep.subr.mxu0 %v88
    %120 = vmatpush1.msra.mxu0 %v87
    %121 = vmatprep.subr.mxu0 %v90
    %122 = vmatpush1.msra.mxu0 %v89
    %123 = vmatprep.subr.mxu0 %v92
    %124 = vmatpush1.msra.mxu0 %v91
    %125 = vmatprep.subr.mxu0 %v94
    %126 = vmatpush1.msra.mxu0 %v93
    %127 = vmatprep.subr.mxu0 %v96
    %128 = vmatpush1.msra.mxu0 %v95
    %129 = vmatprep.subr.mxu0 %v98
    %130 = vmatpush1.msra.mxu0 %v97
    %131 = vmatprep.subr.mxu0 %v100
    %132 = vmatpush1.msra.mxu0 %v99
    %133 = vmatprep.subr.mxu0 0.0
    %134 = vmatpush1.msra.mxu0 0.0
    %135 = vmatprep.subr.mxu0 0.0
    %136 = vmatpush1.msra.mxu0 0.0
    %137 = vmatprep.subr.mxu0 0.0
    %138 = vmatpush1.msra.mxu0 0.0
    %139 = vmatprep.subr.mxu0 0.0
    %140 = vmatpush1.msra.mxu0 0.0
    %141 = vmatprep.subr.mxu0 0.0
    %142 = vmatpush1.msra.mxu0 0.0
    %143 = vmatprep.subr.mxu0 0.0
    %144 = vmatpush1.msra.mxu0 0.0
    %145 = vmatprep.subr.mxu0 0.0
    %146 = vmatpush1.msra.mxu0 0.0
    %147 = vmatprep.subr.mxu0 0.0
    %148 = vmatpush1.msra.mxu0 0.0
    %149 = vmatprep.subr.mxu0 0.0
    %150 = vmatpush1.msra.mxu0 0.0
    %151 = vmatprep.subr.mxu0 0.0
    %152 = vmatpush1.msra.mxu0 0.0
    %153 = vmatprep.subr.mxu0 0.0
    %154 = vmatpush1.msra.mxu0 0.0
    %155 = vmatprep.subr.mxu0 0.0
    %156 = vmatpush1.msra.mxu0 0.0
    %157 = vmatprep.subr.mxu0 0.0
    %158 = vmatpush1.msra.mxu0 0.0
    %159 = vmatprep.subr.mxu0 0.0
    %160 = vmatpush1.msra.mxu0 0.0
    %161 = vmatprep.subr.mxu0 0.0
    %162 = vmatpush1.msra.mxu0 0.0
    %163 = vmatprep.subr.mxu0 0.0
    %164 = vmatpush1.msra.mxu0 0.0
    %165 = vmatprep.mubr.f32.mxu0 0.0
    %166 = vmatmul.mubr.f32.gmra.mrb[0].mxu0 %v53
    %v167 = vpop.f32.mrb[0].mxu0
    %v168 = vadd.f32 0.0, %v167
    %v169 = vpop.f32.mrb[0].mxu0
    %v170 = vadd.f32 0.0, %v169
    %171 = vmatprep.mubr.f32.mxu0 0.0
    %172 = vmatmul.mubr.f32.gmra.mrb[0].mxu0 %v54
    %v173 = vpop.f32.mrb[0].mxu0
    %v174 = vadd.f32 0.0, %v173
    %v175 = vpop.f32.mrb[0].mxu0
    %v176 = vadd.f32 0.0, %v175
    %177 = vmatprep.mubr.f32.mxu0 0.0
    %178 = vmatmul.mubr.f32.gmra.mrb[0].mxu0 %v55
    %v179 = vpop.f32.mrb[0].mxu0
    %v180 = vadd.f32 0.0, %v179
    %v181 = vpop.f32.mrb[0].mxu0
    %v182 = vadd.f32 0.0, %v181
    %183 = vmatprep.mubr.f32.mxu0 0.0
    %184 = vmatmul.mubr.f32.gmra.mrb[0].mxu0 %v56
    %v185 = vpop.f32.mrb[0].mxu0
    %v186 = vadd.f32 0.0, %v185
    %v187 = vpop.f32.mrb[0].mxu0
    %v188 = vadd.f32 0.0, %v187
    %189 = vmatprep.mubr.f32.mxu0 0.0
    %190 = vmatmul.mubr.f32.gmra.mrb[0].mxu0 %v57
    %v191 = vpop.f32.mrb[0].mxu0
    %v192 = vadd.f32 0.0, %v191
    %v193 = vpop.f32.mrb[0].mxu0
    %v194 = vadd.f32 0.0, %v193
    %195 = vmatprep.mubr.f32.mxu0 0.0
    %196 = vmatmul.mubr.f32.gmra.mrb[0].mxu0 %v58
    %v197 = vpop.f32.mrb[0].mxu0
    %v198 = vadd.f32 0.0, %v197
    %v199 = vpop.f32.mrb[0].mxu0
    %v200 = vadd.f32 0.0, %v199
    %201 = vmatprep.mubr.f32.mxu0 0.0
    %202 = vmatmul.mubr.f32.gmra.mrb[0].mxu0 %v59
    %v203 = vpop.f32.mrb[0].mxu0
    %v204 = vadd.f32 0.0, %v203
    %v205 = vpop.f32.mrb[0].mxu0
    %v206 = vadd.f32 0.0, %v205
    %207 = vmatprep.mubr.f32.mxu0 0.0
    %208 = vmatmul.mubr.f32.gmra.mrb[0].mxu0 %v60
    %v209 = vpop.f32.mrb[0].mxu0
    %v210 = vadd.f32 0.0, %v209
    %v211 = vpop.f32.mrb[0].mxu0
    %v212 = vadd.f32 0.0, %v211
    %213 = vmatprep.mubr.f32.mxu0 0.0
    %214 = vmatmul.mubr.f32.gmra.mrb[0].mxu0 %v61
    %v215 = vpop.f32.mrb[0].mxu0
    %v216 = vadd.f32 0.0, %v215
    %v217 = vpop.f32.mrb[0].mxu0
    %v218 = vadd.f32 0.0, %v217
    %219 = vmatprep.mubr.f32.mxu0 0.0
    %220 = vmatmul.mubr.f32.gmra.mrb[0].mxu0 %v62
    %v221 = vpop.f32.mrb[0].mxu0
    %v222 = vadd.f32 0.0, %v221
    %v223 = vpop.f32.mrb[0].mxu0
    %v224 = vadd.f32 0.0, %v223
    %225 = vmatprep.mubr.f32.mxu0 0.0
    %226 = vmatmul.mubr.f32.gmra.mrb[0].mxu0 %v63
    %v227 = vpop.f32.mrb[0].mxu0
    %v228 = vadd.f32 0.0, %v227
    %v229 = vpop.f32.mrb[0].mxu0
    %v230 = vadd.f32 0.0, %v229
    %231 = vmatprep.mubr.f32.mxu0 0.0
    %232 = vmatmul.mubr.f32.gmra.mrb[0].mxu0 %v64
    %v233 = vpop.f32.mrb[0].mxu0
    %v234 = vadd.f32 0.0, %v233
    %v235 = vpop.f32.mrb[0].mxu0
    %v236 = vadd.f32 0.0, %v235
    %237 = vmatprep.mubr.f32.mxu0 0.0
    %238 = vmatmul.mubr.f32.gmra.mrb[0].mxu0 %v65
    %v239 = vpop.f32.mrb[0].mxu0
    %v240 = vadd.f32 0.0, %v239
    %v241 = vpop.f32.mrb[0].mxu0
    %v242 = vadd.f32 0.0, %v241
    %243 = vmatprep.mubr.f32.mxu0 0.0
    %244 = vmatmul.mubr.f32.gmra.mrb[0].mxu0 %v66
    %v245 = vpop.f32.mrb[0].mxu0
    %v246 = vadd.f32 0.0, %v245
    %v247 = vpop.f32.mrb[0].mxu0
    %v248 = vadd.f32 0.0, %v247
    %249 = vmatprep.mubr.f32.mxu0 0.0
    %250 = vmatmul.mubr.f32.gmra.mrb[0].mxu0 %v67
    %v251 = vpop.f32.mrb[0].mxu0
    %v252 = vadd.f32 0.0, %v251
    %v253 = vpop.f32.mrb[0].mxu0
    %v254 = vadd.f32 0.0, %v253
    %255 = vmatprep.mubr.f32.mxu0 0.0
    %256 = vmatmul.mubr.f32.gmra.mrb[0].mxu0 %v68
    %v257 = vpop.f32.mrb[0].mxu0
    %v258 = vadd.f32 0.0, %v257
    %v259 = vpop.f32.mrb[0].mxu0
    %v260 = vadd.f32 0.0, %v259
    %261 = vdwg.mxu0
    %v262 = vld [vmem:[#allocation7] sm:$0x3]
    %v263 = vadd.f32 %v168, %v174
    %v264 = vadd.f32 %v263, %v180
    %v265 = vadd.f32 %v264, %v186
    %v266 = vadd.f32 %v265, %v192
    %v267 = vadd.f32 %v266, %v198
    %v268 = vadd.f32 %v267, %v204
    %v269 = vadd.f32 %v268, %v210
    %v270 = vadd.f32 %v269, %v216
    %v271 = vadd.f32 %v270, %v222
    %v272 = vadd.f32 %v271, %v228
    %v273 = vadd.f32 %v272, %v234
    %v274 = vadd.f32 %v273, %v240
    %v275 = vadd.f32 %v274, %v246
    %v276 = vadd.f32 %v275, %v252
    %v277 = vadd.f32 %v276, %v258
    %v278 = vrot.slane %v277, 4
    %v279 = vadd.f32 %v277, %v278
    %v280 = vrot.slane %v279, 2
    %v281 = vadd.f32 %v279, %v280
    %v282 = vrot.slane %v281, 1
    %v283 = vadd.f32 %v281, %v282
    %v284 = vadd.f32 %v170, %v176
    %v285 = vadd.f32 %v284, %v182
    %v286 = vadd.f32 %v285, %v188
    %v287 = vadd.f32 %v286, %v194
    %v288 = vadd.f32 %v287, %v200
    %v289 = vadd.f32 %v288, %v206
    %v290 = vadd.f32 %v289, %v212
    %v291 = vadd.f32 %v290, %v218
    %v292 = vadd.f32 %v291, %v224
    %v293 = vadd.f32 %v292, %v230
    %v294 = vadd.f32 %v293, %v236
    %v295 = vadd.f32 %v294, %v242
    %v296 = vadd.f32 %v295, %v248
    %v297 = vadd.f32 %v296, %v254
    %v298 = vadd.f32 %v297, %v260
    %v299 = vrot.slane %v298, 4
    %v300 = vadd.f32 %v298, %v299
    %v301 = vrot.slane %v300, 2
    %v302 = vadd.f32 %v300, %v301
    %v303 = vrot.slane %v302, 1
    %v304 = vadd.f32 %v302, %v303
    %v307 = vcombine.low %v283, %v304
    %v309 = vunpack.c.l.s4 1966171168
    %v310 = vunpack.c.0.s8 %v309
    %v311 = vlaneseq
    %v312 = vshrl.u32 %v311, 7
    %v313 = vsub.s32 %v310, %v312
    %v314 = vrot.slane %v307, %v313
    %v316 = vunpack.c.l.s4 1966171168
    %v317 = vunpack.c.0.s8 %v316
    %v318 = vlaneseq
    %v319 = vshrl.u32 %v318, 7
    %v320 = vsub.s32 %v317, %v319
    %v321 = vrot.slane %v314, %v320
    %v323 = vadd.f32 %v262, %v321
    %v324 = vlaneseq
    %vm325 = vcmp.ge.s32.totalorder %v324, 0
    %vm326 = vcmp.lt.s32.totalorder %v324, 256
    %vm327 = vmand %vm325, %vm326
    %328 = vst.msk [vmem:[#allocation7] sm:$0x3] %vm327, %v323
    %v329 = vld [vmem:[#allocation8] sm:$0x3]
    %v330 = vmul.f32 %v168, %v168
    %v331 = vmul.f32 %v170, %v170
    %v332 = vmul.f32 %v174, %v174
    %v333 = vmul.f32 %v176, %v176
    %v334 = vmul.f32 %v180, %v180
    %v335 = vmul.f32 %v182, %v182
    %v336 = vmul.f32 %v186, %v186
    %v337 = vmul.f32 %v188, %v188
    %v338 = vmul.f32 %v192, %v192
    %v339 = vmul.f32 %v194, %v194
    %v340 = vmul.f32 %v198, %v198
    %v341 = vmul.f32 %v200, %v200
    %v342 = vmul.f32 %v204, %v204
    %v343 = vmul.f32 %v206, %v206
    %v344 = vmul.f32 %v210, %v210
    %v345 = vmul.f32 %v212, %v212
    %v346 = vmul.f32 %v216, %v216
    %v347 = vmul.f32 %v218, %v218
    %v348 = vmul.f32 %v222, %v222
    %v349 = vmul.f32 %v224, %v224
    %v350 = vmul.f32 %v228, %v228
    %v351 = vmul.f32 %v230, %v230
    %v352 = vmul.f32 %v234, %v234
    %v353 = vmul.f32 %v236, %v236
    %v354 = vmul.f32 %v240, %v240
    %v355 = vmul.f32 %v242, %v242
    %v356 = vmul.f32 %v246, %v246
    %v357 = vmul.f32 %v248, %v248
    %v358 = vmul.f32 %v252, %v252
    %v359 = vmul.f32 %v254, %v254
    %v360 = vmul.f32 %v258, %v258
    %v361 = vmul.f32 %v260, %v260
    %v362 = vadd.f32 %v330, %v332
    %v363 = vadd.f32 %v362, %v334
    %v364 = vadd.f32 %v363, %v336
    %v365 = vadd.f32 %v364, %v338
    %v366 = vadd.f32 %v365, %v340
    %v367 = vadd.f32 %v366, %v342
    %v368 = vadd.f32 %v367, %v344
    %v369 = vadd.f32 %v368, %v346
    %v370 = vadd.f32 %v369, %v348
    %v371 = vadd.f32 %v370, %v350
    %v372 = vadd.f32 %v371, %v352
    %v373 = vadd.f32 %v372, %v354
    %v374 = vadd.f32 %v373, %v356
    %v375 = vadd.f32 %v374, %v358
    %v376 = vadd.f32 %v375, %v360
    %v377 = vrot.slane %v376, 4
    %v378 = vadd.f32 %v376, %v377
    %v379 = vrot.slane %v378, 2
    %v380 = vadd.f32 %v378, %v379
    %v381 = vrot.slane %v380, 1
    %v382 = vadd.f32 %v380, %v381
    %v383 = vadd.f32 %v331, %v333
    %v384 = vadd.f32 %v383, %v335
    %v385 = vadd.f32 %v384, %v337
    %v386 = vadd.f32 %v385, %v339
    %v387 = vadd.f32 %v386, %v341
    %v388 = vadd.f32 %v387, %v343
    %v389 = vadd.f32 %v388, %v345
    %v390 = vadd.f32 %v389, %v347
    %v391 = vadd.f32 %v390, %v349
    %v392 = vadd.f32 %v391, %v351
    %v393 = vadd.f32 %v392, %v353
    %v394 = vadd.f32 %v393, %v355
    %v395 = vadd.f32 %v394, %v357
    %v396 = vadd.f32 %v395, %v359
    %v397 = vadd.f32 %v396, %v361
    %v398 = vrot.slane %v397, 4
    %v399 = vadd.f32 %v397, %v398
    %v400 = vrot.slane %v399, 2
    %v401 = vadd.f32 %v399, %v400
    %v402 = vrot.slane %v401, 1
    %v403 = vadd.f32 %v401, %v402
    %v406 = vcombine.low %v382, %v403
    %v408 = vunpack.c.l.s4 1966171168
    %v409 = vunpack.c.0.s8 %v408
    %v410 = vlaneseq
    %v411 = vshrl.u32 %v410, 7
    %v412 = vsub.s32 %v409, %v411
    %v413 = vrot.slane %v406, %v412
    %v415 = vunpack.c.l.s4 1966171168
    %v416 = vunpack.c.0.s8 %v415
    %v417 = vlaneseq
    %v418 = vshrl.u32 %v417, 7
    %v419 = vsub.s32 %v416, %v418
    %v420 = vrot.slane %v413, %v419
    %v422 = vadd.f32 %v329, %v420
    %423 = vst.msk [vmem:[#allocation8] sm:$0x3] %vm327, %v422
    // Predicated region
    $region22: #{tpu_custom_call.1} parent=1 // pred_check
      _
    $region23: #{tpu_custom_call.1} parent=1 // pred_check_branch
      %425 = sbr.rel (0) target = $region25
    $region24: #{tpu_custom_call.1} parent=1 // pred_region
      %s427 = ssub.s32 32, 32
      %428 = vsyncadd [#allocation4], %s427
      %s430 = sshll.u32 [#allocation7], 4
      %s431 = int_to_ptr.vmem [resolvable:$true] %s430
      %433 = dma.vmem_to_hbm [thread:$0]  %s431, 32, %s2, [#allocation4]
    $region25: #{tpu_custom_call.1} parent=1 // pred_fallthru
      _
    // Predicated region
    $region26: #{tpu_custom_call.1} parent=1 // pred_check
      _
    $region27: #{tpu_custom_call.1} parent=1 // pred_check_branch
      %435 = sbr.rel (0) target = $region29
    $region28: #{tpu_custom_call.1} parent=1 // pred_region
      %s437 = ssub.s32 32, 32
      %438 = vsyncadd [#allocation9], %s437
      %s440 = sshll.u32 [#allocation8], 4
      %s441 = int_to_ptr.vmem [resolvable:$true] %s440
      %443 = dma.vmem_to_hbm [thread:$0]  %s441, 32, %s3, [#allocation9]
    $region29: #{tpu_custom_call.1} parent=1 // pred_fallthru
      _
    // Predicated region
    $region30: #{tpu_custom_call.1} parent=1 // pred_check
      _
    $region31: #{tpu_custom_call.1} parent=1 // pred_check_branch
      %445 = sbr.rel (0) target = $region33
    $region32: #{tpu_custom_call.1} parent=1 // pred_region
      %446 = dma.done [#allocation4], 32
    $region33: #{tpu_custom_call.1} parent=1 // pred_fallthru
      _
    // Predicated region
    $region34: #{tpu_custom_call.1} parent=1 // pred_check
      _
    $region35: #{tpu_custom_call.1} parent=1 // pred_check_branch
      %448 = sbr.rel (0) target = $region37
    $region36: #{tpu_custom_call.1} parent=1 // pred_region
      %449 = dma.done [#allocation9], 32
    $region37: #{tpu_custom_call.1} parent=1 // pred_fallthru
      _
    %450 = vsyncpa [#allocation3], 1
    %451 = vsyncpa [#allocation6], 1
    %452 = vsyncpa [#allocation4], 1
    %453 = vsyncpa [#allocation9], 1

</llo_original>
